<compile_context>
chip_gen: v7x
topology: tpu7x:2x2x1
jax: 0.10.0
libtpu: 0.0.40
codegen_flags: <defaults>
</compile_context>

<pallas_src>
import functools

import jax
import jax.numpy as jnp
from jax.experimental import pallas as pl
from jax.experimental.pallas import tpu as pltpu


def _vae_kernel(x_ref, eps_ref,
                w1_ref, b1_ref,      # img2hid                (D, H), (1, H)
                wms_ref, bms_ref,    # fused [mu|pad|sig|pad] (H, 2*ZP), (1, 2*ZP)
                wz_ref, bz_ref,      # z_2hid (zero-pad rows) (ZP, H), (1, H)
                wo_ref, bo_ref,      # hid_2img               (H, D), (1, D)
                xrec_ref, musig_ref):
    # ---- encode: h = relu(x @ W1 + b1) ----
    x = x_ref[...].astype(jnp.bfloat16)
    h = jnp.dot(x, w1_ref[...], preferred_element_type=jnp.float32) + b1_ref[...]
    h = jnp.maximum(h, 0.0)

    # ---- fused, 128-lane-padded mu|sigma head (one lane-dense matmul/store) ----
    musig = jnp.dot(h.astype(jnp.bfloat16), wms_ref[...],
                    preferred_element_type=jnp.float32) + bms_ref[...]
    zp = musig.shape[-1] // 2            # = ZP (a multiple of 128)
    mu = musig[:, :zp]                   # vreg-aligned slice (free view)
    sigma = musig[:, zp:]                # vreg-aligned slice (free view)

    # ---- reparameterize: epsilon ~ U[0,1) (torch.rand_like semantics) ----
    # Padded lanes have mu == sigma == 0, so z is 0 there and the zero rows of
    # wz_ref make them irrelevant to the decoder.
    z = mu + sigma * eps_ref[...]

    # ---- decode: x_rec = sigmoid(relu(z @ Wz + bz) @ Wo + bo) ----
    h2 = jnp.dot(z.astype(jnp.bfloat16), wz_ref[...],
                 preferred_element_type=jnp.float32) + bz_ref[...]
    h2 = jnp.maximum(h2, 0.0)
    logits = jnp.dot(h2.astype(jnp.bfloat16), wo_ref[...],
                     preferred_element_type=jnp.float32) + bo_ref[...]

    xrec_ref[...] = jax.nn.sigmoid(logits).astype(xrec_ref.dtype)
    musig_ref[...] = musig.astype(musig_ref.dtype)


def pack_params(params, lane_pad=128):
    """One-time (outside jit) weight packing: bf16 casts + padded fused head.

    Layout of the fused head: columns [0:Z] = W_mu, [Z:ZP] = 0,
    [ZP:ZP+Z] = W_sigma, [ZP+Z:2*ZP] = 0, with ZP = round_up(Z, 128).
    z_2hid is padded with zero rows to (ZP, H) so the latent never needs a
    sub-128 slice inside the kernel.
    """
    D, H = params["w1"].shape
    Z = params["wmu"].shape[1]
    ZP = ((Z + lane_pad - 1) // lane_pad) * lane_pad
    bf16 = jnp.bfloat16

    wms = jnp.zeros((H, 2 * ZP), jnp.float32)
    wms = wms.at[:, :Z].set(params["wmu"]).at[:, ZP:ZP + Z].set(params["wsg"])
    bms = jnp.zeros((1, 2 * ZP), jnp.float32)
    bms = bms.at[:, :Z].set(params["bmu"]).at[:, ZP:ZP + Z].set(params["bsg"])
    wz = jnp.zeros((ZP, H), jnp.float32).at[:Z, :].set(params["wz"])

    return dict(
        w1=params["w1"].astype(bf16), b1=params["b1"],
        wms=wms.astype(bf16), bms=bms,
        wz=wz.astype(bf16), bz=params["bz"],
        wo=params["wo"].astype(bf16), bo=params["bo"],
    )


@functools.partial(jax.jit, static_argnames=("z_dim", "block_batch"))
def vae_forward(x, packed, key, *, z_dim, block_batch=1024):
    """x: (B, input_dim), f32 or bf16 (bf16 preferred; the kernel is mem-bound).

    packed: output of pack_params().  key: jax.random key for epsilon ~ U[0,1)
    (torch.rand_like semantics).  Returns (x_reconstructed[bf16], mu, sigma).
    """
    B, D = x.shape
    H = packed["w1"].shape[1]
    ZP = packed["wz"].shape[0]                 # padded latent width (mult of 128)

    # Batch tile: multiple of 8 sublanes; cap at ~B/2 so the grid has >= 2 steps
    # and both v7x TensorCores get work (v5e/v6e are indifferent).
    if B >= 16:
        tb = min(block_batch, max(8, ((B // 2) // 8) * 8))
        tb = max(8, (tb // 8) * 8)
    else:
        tb = B                                  # single full block (always legal)
    grid = (pl.cdiv(B, tb),)

    # epsilon ~ U[0,1) at padded width -> lane-dense loads; only the first z_dim
    # columns matter (sigma is zero on padded lanes).
    eps = jax.random.uniform(key, (B, ZP), jnp.float32)

    def rowblk(cols):
        return pl.BlockSpec((tb, cols), lambda i: (i, 0))        # streamed

    def resident(shape):
        return pl.BlockSpec(shape, lambda i: (0, 0))             # VMEM-resident
        # TODO(synk): at much larger H/D on v7x, single-buffer these with
        # pipeline_mode=pl.Buffered(1) to halve resident VMEM.

    in_specs = [
        rowblk(D),                                    # x
        rowblk(ZP),                                   # eps
        resident((D, H)), resident((1, H)),           # w1, b1
        resident((H, 2 * ZP)), resident((1, 2 * ZP)), # wms, bms (padded fused head)
        resident((ZP, H)), resident((1, H)),          # wz (zero-pad rows), bz
        resident((H, D)), resident((1, D)),           # wo, bo
    ]
    out_specs = (rowblk(D), rowblk(2 * ZP))
    out_shape = (jax.ShapeDtypeStruct((B, D), jnp.bfloat16),      # x_reconstructed
                 jax.ShapeDtypeStruct((B, 2 * ZP), jnp.float32))  # mu|pad|sigma|pad

    # VMEM budget: double-buffered residents + streamed tiles, + headroom,
    # capped well under v7x's 64 MiB physical VMEM.
    weight_bytes = sum(int(packed[k].size) * packed[k].dtype.itemsize
                       for k in ("w1", "b1", "wms", "bms", "wz", "bz", "wo", "bo"))
    stream_bytes = tb * (D * x.dtype.itemsize      # x
                         + ZP * 4                  # eps
                         + D * 2                   # x_rec (bf16)
                         + 2 * ZP * 4)             # musig (f32)
    vmem_limit = int(min(2 * (weight_bytes + stream_bytes) + (8 << 20), 48 << 20))

    flops = 2 * B * (D * H + H * 2 * ZP + ZP * H + H * D)
    bytes_accessed = int(B * (D * x.dtype.itemsize + ZP * 4 + D * 2 + 2 * ZP * 4)
                         + weight_bytes)
    cost = pl.CostEstimate(flops=flops, transcendentals=B * D,
                           bytes_accessed=bytes_accessed)

    x_rec, musig = pl.pallas_call(
        _vae_kernel,
        grid=grid,
        in_specs=in_specs,
        out_specs=out_specs,
        out_shape=out_shape,
        compiler_params=pltpu.CompilerParams(
            dimension_semantics=("parallel",),
            vmem_limit_bytes=vmem_limit),
        cost_estimate=cost,
    )(x, eps,
      packed["w1"], packed["b1"], packed["wms"], packed["bms"],
      packed["wz"], packed["bz"], packed["wo"], packed["bo"])

    mu = musig[:, :z_dim]
    sigma = musig[:, ZP:ZP + z_dim]
    return x_rec, mu, sigma


def _init_linear(key, fan_in, fan_out):
    # Mimic PyTorch nn.Linear init: U(-1/sqrt(fan_in), 1/sqrt(fan_in)).
    kw, kb = jax.random.split(key)
    bound = 1.0 / jnp.sqrt(jnp.float32(fan_in))
    w = jax.random.uniform(kw, (fan_in, fan_out), jnp.float32, -bound, bound)
    b = jax.random.uniform(kb, (1, fan_out), jnp.float32, -bound, bound)
    return w, b


def make_params(key, input_dim, h_dim, z_dim):
    ks = jax.random.split(key, 5)
    w1, b1 = _init_linear(ks[0], input_dim, h_dim)     # img2hid
    wmu, bmu = _init_linear(ks[1], h_dim, z_dim)       # hid_2_mu
    wsg, bsg = _init_linear(ks[2], h_dim, z_dim)       # hid_2sigma
    wz, bz = _init_linear(ks[3], z_dim, h_dim)         # z_2hid
    wo, bo = _init_linear(ks[4], h_dim, input_dim)     # hid_2img
    return dict(w1=w1, b1=b1, wmu=wmu, bmu=bmu, wsg=wsg, bsg=bsg,
                wz=wz, bz=bz, wo=wo, bo=bo)


if __name__ == "__main__":
    # Small, TPU-friendly shapes implied by the module's forward
    # (flattened images -> hidden -> latent -> hidden -> images).
    B, INPUT_DIM, H_DIM, Z_DIM = 16, 256, 128, 32

    key = jax.random.PRNGKey(0)
    kx, kp, ke = jax.random.split(key, 3)

    x = jax.random.uniform(kx, (B, INPUT_DIM), jnp.float32)   # images in [0,1)
    params = make_params(kp, INPUT_DIM, H_DIM, Z_DIM)
    packed = pack_params(params)                # one-time bf16 packing (not per-call)

    # Stream bf16 at the boundary: the kernel is HBM-bandwidth-bound.
    x_in = x.astype(jnp.bfloat16)
    x_rec, mu, sigma = vae_forward(x_in, packed, ke, z_dim=Z_DIM, block_batch=1024)
    jax.block_until_ready((x_rec, mu, sigma))

    # Pure-JAX f32 reference with the SAME epsilon draw (first Z columns of the
    # padded draw are the ones the kernel effectively uses).
    ZP = packed["wz"].shape[0]
    eps = jax.random.uniform(ke, (B, ZP), jnp.float32)[:, :Z_DIM]
    h_ref = jax.nn.relu(x @ params["w1"] + params["b1"])
    mu_ref = h_ref @ params["wmu"] + params["bmu"]
    sg_ref = h_ref @ params["wsg"] + params["bsg"]
    z_ref = mu_ref + sg_ref * eps
    h2_ref = jax.nn.relu(z_ref @ params["wz"] + params["bz"])
    xr_ref = jax.nn.sigmoid(h2_ref @ params["wo"] + params["bo"])

    x_rec_f32 = x_rec.astype(jnp.float32)
    assert x_rec.shape == (B, INPUT_DIM)
    assert mu.shape == (B, Z_DIM)
    assert sigma.shape == (B, Z_DIM)
    assert bool(jnp.all(jnp.isfinite(x_rec_f32)))
    assert bool(jnp.all((x_rec_f32 >= 0.0) & (x_rec_f32 <= 1.0)))
    # bf16 MXU inputs / bf16 x stream vs f32 reference -> loose tolerance.
    assert bool(jnp.allclose(mu, mu_ref, atol=3e-2, rtol=3e-2))
    assert bool(jnp.allclose(sigma, sg_ref, atol=3e-2, rtol=3e-2))
    assert bool(jnp.allclose(x_rec_f32, xr_ref, atol=3e-2, rtol=3e-2))

    print("KERNEL_OK")
</pallas_src>

<mosaic_0001>
module attributes {stable_mosaic.version = 11 : i64} {
  func.func @_vae_kernel(%arg0: i32, %arg1: memref<8x256xbf16, #tpu.memory_space<vmem>>, %arg2: memref<8x128xf32, #tpu.memory_space<vmem>>, %arg3: memref<256x128xbf16, #tpu.memory_space<vmem>>, %arg4: memref<1x128xf32, #tpu.memory_space<vmem>>, %arg5: memref<128x256xbf16, #tpu.memory_space<vmem>>, %arg6: memref<1x256xf32, #tpu.memory_space<vmem>>, %arg7: memref<128x128xbf16, #tpu.memory_space<vmem>>, %arg8: memref<1x128xf32, #tpu.memory_space<vmem>>, %arg9: memref<128x256xbf16, #tpu.memory_space<vmem>>, %arg10: memref<1x256xf32, #tpu.memory_space<vmem>>, %arg11: memref<8x256xbf16, #tpu.memory_space<vmem>>, %arg12: memref<8x256xf32, #tpu.memory_space<vmem>>) attributes {dimension_semantics = [#tpu.dimension_semantics<parallel>], iteration_bounds = array<i64: 2>, scalar_prefetch = 0 : i64, scratch_operands = 0 : i64, tpu.core_type = #tpu.core_type<tc>, window_params = [{transform_indices = @transform_0, window_bounds = array<i64: 8, 256>}, {transform_indices = @transform_1, window_bounds = array<i64: 8, 128>}, {pipeline_mode = #tpu.pipeline_mode<synchronous>, transform_indices = @transform_2, window_bounds = array<i64: 256, 128>}, {pipeline_mode = #tpu.pipeline_mode<synchronous>, transform_indices = @transform_3, window_bounds = array<i64: 1, 128>}, {pipeline_mode = #tpu.pipeline_mode<synchronous>, transform_indices = @transform_4, window_bounds = array<i64: 128, 256>}, {pipeline_mode = #tpu.pipeline_mode<synchronous>, transform_indices = @transform_5, window_bounds = array<i64: 1, 256>}, {pipeline_mode = #tpu.pipeline_mode<synchronous>, transform_indices = @transform_6, window_bounds = array<i64: 128, 128>}, {pipeline_mode = #tpu.pipeline_mode<synchronous>, transform_indices = @transform_7, window_bounds = array<i64: 1, 128>}, {pipeline_mode = #tpu.pipeline_mode<synchronous>, transform_indices = @transform_8, window_bounds = array<i64: 128, 256>}, {pipeline_mode = #tpu.pipeline_mode<synchronous>, transform_indices = @transform_9, window_bounds = array<i64: 1, 256>}, {transform_indices = @transform_10, window_bounds = array<i64: 8, 256>}, {transform_indices = @transform_11, window_bounds = array<i64: 8, 256>}]} {
    %c0 = arith.constant 0 : index
    %c0_0 = arith.constant 0 : index
    %0 = vector.load %arg1[%c0, %c0_0] : memref<8x256xbf16, #tpu.memory_space<vmem>>, vector<8x256xbf16>
    %c0_1 = arith.constant 0 : index
    %c0_2 = arith.constant 0 : index
    %1 = vector.load %arg3[%c0_1, %c0_2] : memref<256x128xbf16, #tpu.memory_space<vmem>>, vector<256x128xbf16>
    %cst = arith.constant dense<0.000000e+00> : vector<8x128xf32>
    %2 = tpu.matmul %0, %1, %cst {dimension_numbers = #tpu.dot_dimension_numbers<[1], [0], [0], [1], [0, 0, 1, 1], [], []>} : vector<8x256xbf16>, vector<256x128xbf16>, vector<8x128xf32> -> vector<8x128xf32>
    %c0_3 = arith.constant 0 : index
    %c0_4 = arith.constant 0 : index
    %3 = vector.load %arg4[%c0_3, %c0_4] : memref<1x128xf32, #tpu.memory_space<vmem>>, vector<1x128xf32>
    %4 = vector.broadcast %3 : vector<1x128xf32> to vector<8x128xf32>
    %5 = arith.addf %2, %4 : vector<8x128xf32>
    %cst_5 = arith.constant 0.000000e+00 : f32
    %6 = vector.broadcast %cst_5 : f32 to vector<8x128xf32>
    %7 = arith.maximumf %5, %6 : vector<8x128xf32>
    %8 = arith.truncf %7 : vector<8x128xf32> to vector<8x128xbf16>
    %c0_6 = arith.constant 0 : index
    %c0_7 = arith.constant 0 : index
    %9 = vector.load %arg5[%c0_6, %c0_7] : memref<128x256xbf16, #tpu.memory_space<vmem>>, vector<128x256xbf16>
    %cst_8 = arith.constant dense<0.000000e+00> : vector<8x256xf32>
    %10 = tpu.matmul %8, %9, %cst_8 {dimension_numbers = #tpu.dot_dimension_numbers<[1], [0], [0], [1], [0, 0, 1, 1], [], []>} : vector<8x128xbf16>, vector<128x256xbf16>, vector<8x256xf32> -> vector<8x256xf32>
    %c0_9 = arith.constant 0 : index
    %c0_10 = arith.constant 0 : index
    %11 = vector.load %arg6[%c0_9, %c0_10] : memref<1x256xf32, #tpu.memory_space<vmem>>, vector<1x256xf32>
    %12 = vector.broadcast %11 : vector<1x256xf32> to vector<8x256xf32>
    %13 = arith.addf %10, %12 : vector<8x256xf32>
    %14 = vector.extract_strided_slice %13 {offsets = [0, 0], sizes = [8, 128], strides = [1, 1]} : vector<8x256xf32> to vector<8x128xf32>
    %15 = vector.extract_strided_slice %13 {offsets = [0, 128], sizes = [8, 128], strides = [1, 1]} : vector<8x256xf32> to vector<8x128xf32>
    %c0_11 = arith.constant 0 : index
    %c0_12 = arith.constant 0 : index
    %16 = vector.load %arg2[%c0_11, %c0_12] : memref<8x128xf32, #tpu.memory_space<vmem>>, vector<8x128xf32>
    %17 = arith.mulf %15, %16 : vector<8x128xf32>
    %18 = arith.addf %14, %17 : vector<8x128xf32>
    %19 = arith.truncf %18 : vector<8x128xf32> to vector<8x128xbf16>
    %c0_13 = arith.constant 0 : index
    %c0_14 = arith.constant 0 : index
    %20 = vector.load %arg7[%c0_13, %c0_14] : memref<128x128xbf16, #tpu.memory_space<vmem>>, vector<128x128xbf16>
    %cst_15 = arith.constant dense<0.000000e+00> : vector<8x128xf32>
    %21 = tpu.matmul %19, %20, %cst_15 {dimension_numbers = #tpu.dot_dimension_numbers<[1], [0], [0], [1], [0, 0, 1, 1], [], []>} : vector<8x128xbf16>, vector<128x128xbf16>, vector<8x128xf32> -> vector<8x128xf32>
    %c0_16 = arith.constant 0 : index
    %c0_17 = arith.constant 0 : index
    %22 = vector.load %arg8[%c0_16, %c0_17] : memref<1x128xf32, #tpu.memory_space<vmem>>, vector<1x128xf32>
    %23 = vector.broadcast %22 : vector<1x128xf32> to vector<8x128xf32>
    %24 = arith.addf %21, %23 : vector<8x128xf32>
    %cst_18 = arith.constant 0.000000e+00 : f32
    %25 = vector.broadcast %cst_18 : f32 to vector<8x128xf32>
    %26 = arith.maximumf %24, %25 : vector<8x128xf32>
    %27 = arith.truncf %26 : vector<8x128xf32> to vector<8x128xbf16>
    %c0_19 = arith.constant 0 : index
    %c0_20 = arith.constant 0 : index
    %28 = vector.load %arg9[%c0_19, %c0_20] : memref<128x256xbf16, #tpu.memory_space<vmem>>, vector<128x256xbf16>
    %cst_21 = arith.constant dense<0.000000e+00> : vector<8x256xf32>
    %29 = tpu.matmul %27, %28, %cst_21 {dimension_numbers = #tpu.dot_dimension_numbers<[1], [0], [0], [1], [0, 0, 1, 1], [], []>} : vector<8x128xbf16>, vector<128x256xbf16>, vector<8x256xf32> -> vector<8x256xf32>
    %c0_22 = arith.constant 0 : index
    %c0_23 = arith.constant 0 : index
    %30 = vector.load %arg10[%c0_22, %c0_23] : memref<1x256xf32, #tpu.memory_space<vmem>>, vector<1x256xf32>
    %31 = vector.broadcast %30 : vector<1x256xf32> to vector<8x256xf32>
    %32 = arith.addf %29, %31 : vector<8x256xf32>
    %33 = arith.negf %32 : vector<8x256xf32>
    %34 = math.exp %33 : vector<8x256xf32>
    %cst_24 = arith.constant 1.000000e+00 : f32
    %35 = vector.broadcast %cst_24 : f32 to vector<8x256xf32>
    %36 = arith.addf %35, %34 : vector<8x256xf32>
    %37 = arith.divf %35, %36 : vector<8x256xf32>
    %38 = arith.truncf %37 : vector<8x256xf32> to vector<8x256xbf16>
    %c0_25 = arith.constant 0 : index
    %c0_26 = arith.constant 0 : index
    %39 = vector.load %arg11[%c0_25, %c0_26] : memref<8x256xbf16, #tpu.memory_space<vmem>>, vector<8x256xbf16>
    tpu.vector_store %arg11[%c0_25, %c0_26], %38 {strides = array<i32>} : memref<8x256xbf16, #tpu.memory_space<vmem>>, vector<8x256xbf16>,
    %c0_27 = arith.constant 0 : index
    %c0_28 = arith.constant 0 : index
    %40 = vector.load %arg12[%c0_27, %c0_28] : memref<8x256xf32, #tpu.memory_space<vmem>>, vector<8x256xf32>
    tpu.vector_store %arg12[%c0_27, %c0_28], %13 {strides = array<i32>} : memref<8x256xf32, #tpu.memory_space<vmem>>, vector<8x256xf32>,
    return
  }
  func.func @transform_0(%arg0: i32) -> (i32, i32) {
    %c0_i32 = arith.constant 0 : i32
    %c0_i32_0 = arith.constant 0 : i32
    return %arg0, %c0_i32 : i32, i32
  }
  func.func @transform_1(%arg0: i32) -> (i32, i32) {
    %c0_i32 = arith.constant 0 : i32
    %c0_i32_0 = arith.constant 0 : i32
    return %arg0, %c0_i32 : i32, i32
  }
  func.func @transform_2(%arg0: i32) -> (i32, i32) {
    %c0_i32 = arith.constant 0 : i32
    %c0_i32_0 = arith.constant 0 : i32
    %c0_i32_1 = arith.constant 0 : i32
    return %c0_i32, %c0_i32_0 : i32, i32
  }
  func.func @transform_3(%arg0: i32) -> (i32, i32) {
    %c0_i32 = arith.constant 0 : i32
    %c0_i32_0 = arith.constant 0 : i32
    %c0_i32_1 = arith.constant 0 : i32
    return %c0_i32, %c0_i32_0 : i32, i32
  }
  func.func @transform_4(%arg0: i32) -> (i32, i32) {
    %c0_i32 = arith.constant 0 : i32
    %c0_i32_0 = arith.constant 0 : i32
    %c0_i32_1 = arith.constant 0 : i32
    return %c0_i32, %c0_i32_0 : i32, i32
  }
  func.func @transform_5(%arg0: i32) -> (i32, i32) {
    %c0_i32 = arith.constant 0 : i32
    %c0_i32_0 = arith.constant 0 : i32
    %c0_i32_1 = arith.constant 0 : i32
    return %c0_i32, %c0_i32_0 : i32, i32
  }
  func.func @transform_6(%arg0: i32) -> (i32, i32) {
    %c0_i32 = arith.constant 0 : i32
    %c0_i32_0 = arith.constant 0 : i32
    %c0_i32_1 = arith.constant 0 : i32
    return %c0_i32, %c0_i32_0 : i32, i32
  }
  func.func @transform_7(%arg0: i32) -> (i32, i32) {
    %c0_i32 = arith.constant 0 : i32
    %c0_i32_0 = arith.constant 0 : i32
    %c0_i32_1 = arith.constant 0 : i32
    return %c0_i32, %c0_i32_0 : i32, i32
  }
  func.func @transform_8(%arg0: i32) -> (i32, i32) {
    %c0_i32 = arith.constant 0 : i32
    %c0_i32_0 = arith.constant 0 : i32
    %c0_i32_1 = arith.constant 0 : i32
    return %c0_i32, %c0_i32_0 : i32, i32
  }
  func.func @transform_9(%arg0: i32) -> (i32, i32) {
    %c0_i32 = arith.constant 0 : i32
    %c0_i32_0 = arith.constant 0 : i32
    %c0_i32_1 = arith.constant 0 : i32
    return %c0_i32, %c0_i32_0 : i32, i32
  }
  func.func @transform_10(%arg0: i32) -> (i32, i32) {
    %c0_i32 = arith.constant 0 : i32
    %c0_i32_0 = arith.constant 0 : i32
    return %arg0, %c0_i32 : i32, i32
  }
  func.func @transform_11(%arg0: i32) -> (i32, i32) {
    %c0_i32 = arith.constant 0 : i32
    %c0_i32_0 = arith.constant 0 : i32
    return %arg0, %c0_i32 : i32, i32
  }
}

</mosaic_0001>

<llo_original>
// kernel: vae_forward.1
$region0: #{vae_forward.1}
  #allocation0 [shape = 'u32[]', space=smem, size = 0x4, offset = 0x4, fixed_abs, tag = 'smem constant byte address 0x4 - core index']
  #allocation1 [shape = 'u32[144,128]{1,0:T(1,128)}', space=vmem, size = 0x12000, scoped, tag = 'internal scratch']
  %s0 = inlined_call_operand.vmem [shape: bf16[16,256], index: 0, kind: input, shape index: {}]
  %s1 = inlined_call_operand.vmem [shape: f32[16,128], index: 1, kind: input, shape index: {}]
  %s2 = inlined_call_operand.hbm [shape: bf16[256,128], index: 2, kind: input, shape index: {}]
  %s3 = inlined_call_operand.vmem [shape: f32[1,128], index: 3, kind: input, shape index: {}]
  %s4 = inlined_call_operand.hbm [shape: bf16[128,256], index: 4, kind: input, shape index: {}]
  %s5 = inlined_call_operand.vmem [shape: f32[1,256], index: 5, kind: input, shape index: {}]
  %s6 = inlined_call_operand.vmem [shape: bf16[128,128], index: 6, kind: input, shape index: {}]
  %s7 = inlined_call_operand.vmem [shape: f32[1,128], index: 7, kind: input, shape index: {}]
  %s8 = inlined_call_operand.hbm [shape: bf16[128,256], index: 8, kind: input, shape index: {}]
  %s9 = inlined_call_operand.vmem [shape: f32[1,256], index: 9, kind: input, shape index: {}]
  %s10 = inlined_call_operand.hbm [shape: bf16[16,256], index: 10, kind: output, shape index: {0}]
  %s11 = inlined_call_operand.vmem [shape: f32[16,256], index: 11, kind: output, shape index: {1}]
  %12 = xla_tuple %s10, %s11
  %s13 = sld [smem:[#allocation0]]
  $region93: #{vae_forward.1} parent=0
    _
  %s15 = ssub.s32 1, %s13
  %s16 = scalar_select 0, %s15, %s13
  $region1: #{vae_forward.1} parent=0
    #allocation2 [shape = 'u8[65536]{0}', space=vmem, size = 0x10000, scoped, tag = 'input window, operand 2, single buffered']
    #allocation3 [shape = 's32[2]{0}', space=sflag, size = 0x8, scoped, tag = 'scoped memory for vae_forward.1']
    #allocation4 [shape = 's32[2]{0}', space=sflag, size = 0x8, scoped, tag = 'scoped memory for vae_forward.1']
    #allocation5 [shape = 'u8[65536]{0}', space=vmem, size = 0x10000, scoped, tag = 'input window, operand 4, single buffered']
    #allocation6 [shape = 's32[1]{0}', space=sflag, size = 0x4, scoped, tag = 'scoped memory for vae_forward.1']
    #allocation7 [shape = 'u8[65536]{0}', space=vmem, size = 0x10000, scoped, tag = 'input window, operand 8, single buffered']
    #allocation8 [shape = 'u8[8192]{0}', space=vmem, size = 0x2000, scoped, tag = 'output window, operand 0']
    %17 = vsyncpa [#allocation3], 0
    %18 = vsyncpa [#allocation6], 0
    %19 = vsyncpa [#allocation4], 0
    %s20 = scalar_lea.sflag [#allocation4], 1
    %21 = vsyncpa %s20, 0
    loop: start=0, step=1, limit=4
    $region2: #{vae_forward.1} parent=1 // loop_pre_header
      _
    $region3: #{vae_forward.1} parent=1 // loop_header
      %s23 = sphi 0, %s27
      %p24 = scmp.ge.s32.totalorder %s23, 4
      %s33 = sphi 0, %s35
      %s36 = sphi 0, %s33
      %s37 = sphi 0, %s36
      %s53 = sphi 0, %s37
      %s59 = sphi 0, %s61
      %s62 = sphi 0, %s59
      %s63 = sphi 0, %s62
      %s79 = sphi 0, %s63
      %s83 = sphi 0, %s83
      %s85 = sphi 0, %s83
      %s86 = sphi 0, %s85
      %s100 = sphi 0, %s86
      %s104 = sphi 0, %s104
      %s106 = sphi 0, %s104
      %s107 = sphi 0, %s106
      %s121 = sphi 0, %s107
      %s125 = sphi 0, %s125
      %s127 = sphi 0, %s125
      %s128 = sphi 0, %s127
      %s142 = sphi 0, %s128
      %s146 = sphi 0, %s146
      %s148 = sphi 0, %s146
      %s149 = sphi 0, %s148
      %s163 = sphi 0, %s149
      %s167 = sphi 0, %s167
      %s169 = sphi 0, %s167
      %s170 = sphi 0, %s169
      %s184 = sphi 0, %s170
      %s188 = sphi 0, %s188
      %s190 = sphi 0, %s188
      %s191 = sphi 0, %s190
      %s205 = sphi 0, %s191
      %s209 = sphi 0, %s209
      %s211 = sphi 0, %s209
      %s212 = sphi 0, %s211
      %s226 = sphi 0, %s212
      %s230 = sphi 0, %s230
      %s232 = sphi 0, %s230
      %s233 = sphi 0, %s232
      %s247 = sphi 0, %s233
      %s253 = sphi 0, %s255
      %s256 = sphi 0, %s253
      %s257 = sphi 0, %s256
      %s273 = sphi 0, %s257
      %s279 = sphi 0, %s281
      %s282 = sphi 0, %s279
      %s283 = sphi 0, %s282
      %s299 = sphi 0, %s283
    $region4: #{vae_forward.1} parent=1 // loop_header_branch
      %26 = sbr.rel (%p24) target = $region8
    $region5: #{vae_forward.1} parent=1 // loop_body
      %s28 = ssub.s32 %s23, 1
      %s29 = ssub.s32 %s23, 2
      %s30 = sadd.s32 %s23, 1
      %s31 = ssub.s32 %s23, %s30
      %p32 = scmp.eq.s32.totalorder %s31, 0
      %s34 = sadd.s32 %s33, 1
      %s35 = scalar_select %p32, %s33, %s34
      %p38 = pneg %p32
      %p39 = scmp.eq.s32.totalorder %s23, 1
      %p40 = por %p38, %p39
      %p41 = scmp.ne.s32.totalorder %s33, %s36
      %p42 = scmp.eq.s32.totalorder %s23, 0
      %p43 = por %p41, %p42
      %p44 = scmp.ne.s32.totalorder %s33, %s36
      %p45 = scmp.eq.s32.totalorder %s28, 1
      %p46 = por %p44, %p45
      %p47 = scmp.ne.s32.totalorder %s36, %s37
      %p48 = scmp.eq.s32.totalorder %s28, 0
      %p49 = por %p47, %p48
      %p50 = scmp.ne.s32.totalorder %s36, %s37
      %p51 = scmp.eq.s32.totalorder %s29, 1
      %p52 = por %p50, %p51
      %p54 = scmp.ne.s32.totalorder %s37, %s53
      %p55 = scmp.eq.s32.totalorder %s29, 0
      %p56 = por %p54, %p55
      %s57 = ssub.s32 %s23, %s30
      %p58 = scmp.eq.s32.totalorder %s57, 0
      %s60 = sadd.s32 %s59, 1
      %s61 = scalar_select %p58, %s59, %s60
      %p64 = pneg %p58
      %p65 = scmp.eq.s32.totalorder %s23, 1
      %p66 = por %p64, %p65
      %p67 = scmp.ne.s32.totalorder %s59, %s62
      %p68 = scmp.eq.s32.totalorder %s23, 0
      %p69 = por %p67, %p68
      %p70 = scmp.ne.s32.totalorder %s59, %s62
      %p71 = scmp.eq.s32.totalorder %s28, 1
      %p72 = por %p70, %p71
      %p73 = scmp.ne.s32.totalorder %s62, %s63
      %p74 = scmp.eq.s32.totalorder %s28, 0
      %p75 = por %p73, %p74
      %p76 = scmp.ne.s32.totalorder %s62, %s63
      %p77 = scmp.eq.s32.totalorder %s29, 1
      %p78 = por %p76, %p77
      %p80 = scmp.ne.s32.totalorder %s63, %s79
      %p81 = scmp.eq.s32.totalorder %s29, 0
      %p82 = por %p80, %p81
      %s84 = sadd.s32 %s83, 1
      %p87 = scmp.eq.s32.totalorder %s23, 1
      %p88 = scmp.ne.s32.totalorder %s83, %s85
      %p89 = scmp.eq.s32.totalorder %s23, 0
      %p90 = por %p88, %p89
      %p91 = scmp.ne.s32.totalorder %s83, %s85
      %p92 = scmp.eq.s32.totalorder %s28, 1
      %p93 = por %p91, %p92
      %p94 = scmp.ne.s32.totalorder %s85, %s86
      %p95 = scmp.eq.s32.totalorder %s28, 0
      %p96 = por %p94, %p95
      %p97 = scmp.ne.s32.totalorder %s85, %s86
      %p98 = scmp.eq.s32.totalorder %s29, 1
      %p99 = por %p97, %p98
      %p101 = scmp.ne.s32.totalorder %s86, %s100
      %p102 = scmp.eq.s32.totalorder %s29, 0
      %p103 = por %p101, %p102
      %s105 = sadd.s32 %s104, 1
      %p108 = scmp.eq.s32.totalorder %s23, 1
      %p109 = scmp.ne.s32.totalorder %s104, %s106
      %p110 = scmp.eq.s32.totalorder %s23, 0
      %p111 = por %p109, %p110
      %p112 = scmp.ne.s32.totalorder %s104, %s106
      %p113 = scmp.eq.s32.totalorder %s28, 1
      %p114 = por %p112, %p113
      %p115 = scmp.ne.s32.totalorder %s106, %s107
      %p116 = scmp.eq.s32.totalorder %s28, 0
      %p117 = por %p115, %p116
      %p118 = scmp.ne.s32.totalorder %s106, %s107
      %p119 = scmp.eq.s32.totalorder %s29, 1
      %p120 = por %p118, %p119
      %p122 = scmp.ne.s32.totalorder %s107, %s121
      %p123 = scmp.eq.s32.totalorder %s29, 0
      %p124 = por %p122, %p123
      %s126 = sadd.s32 %s125, 1
      %p129 = scmp.eq.s32.totalorder %s23, 1
      %p130 = scmp.ne.s32.totalorder %s125, %s127
      %p131 = scmp.eq.s32.totalorder %s23, 0
      %p132 = por %p130, %p131
      %p133 = scmp.ne.s32.totalorder %s125, %s127
      %p134 = scmp.eq.s32.totalorder %s28, 1
      %p135 = por %p133, %p134
      %p136 = scmp.ne.s32.totalorder %s127, %s128
      %p137 = scmp.eq.s32.totalorder %s28, 0
      %p138 = por %p136, %p137
      %p139 = scmp.ne.s32.totalorder %s127, %s128
      %p140 = scmp.eq.s32.totalorder %s29, 1
      %p141 = por %p139, %p140
      %p143 = scmp.ne.s32.totalorder %s128, %s142
      %p144 = scmp.eq.s32.totalorder %s29, 0
      %p145 = por %p143, %p144
      %s147 = sadd.s32 %s146, 1
      %p150 = scmp.eq.s32.totalorder %s23, 1
      %p151 = scmp.ne.s32.totalorder %s146, %s148
      %p152 = scmp.eq.s32.totalorder %s23, 0
      %p153 = por %p151, %p152
      %p154 = scmp.ne.s32.totalorder %s146, %s148
      %p155 = scmp.eq.s32.totalorder %s28, 1
      %p156 = por %p154, %p155
      %p157 = scmp.ne.s32.totalorder %s148, %s149
      %p158 = scmp.eq.s32.totalorder %s28, 0
      %p159 = por %p157, %p158
      %p160 = scmp.ne.s32.totalorder %s148, %s149
      %p161 = scmp.eq.s32.totalorder %s29, 1
      %p162 = por %p160, %p161
      %p164 = scmp.ne.s32.totalorder %s149, %s163
      %p165 = scmp.eq.s32.totalorder %s29, 0
      %p166 = por %p164, %p165
      %s168 = sadd.s32 %s167, 1
      %p171 = scmp.eq.s32.totalorder %s23, 1
      %p172 = scmp.ne.s32.totalorder %s167, %s169
      %p173 = scmp.eq.s32.totalorder %s23, 0
      %p174 = por %p172, %p173
      %p175 = scmp.ne.s32.totalorder %s167, %s169
      %p176 = scmp.eq.s32.totalorder %s28, 1
      %p177 = por %p175, %p176
      %p178 = scmp.ne.s32.totalorder %s169, %s170
      %p179 = scmp.eq.s32.totalorder %s28, 0
      %p180 = por %p178, %p179
      %p181 = scmp.ne.s32.totalorder %s169, %s170
      %p182 = scmp.eq.s32.totalorder %s29, 1
      %p183 = por %p181, %p182
      %p185 = scmp.ne.s32.totalorder %s170, %s184
      %p186 = scmp.eq.s32.totalorder %s29, 0
      %p187 = por %p185, %p186
      %s189 = sadd.s32 %s188, 1
      %p192 = scmp.eq.s32.totalorder %s23, 1
      %p193 = scmp.ne.s32.totalorder %s188, %s190
      %p194 = scmp.eq.s32.totalorder %s23, 0
      %p195 = por %p193, %p194
      %p196 = scmp.ne.s32.totalorder %s188, %s190
      %p197 = scmp.eq.s32.totalorder %s28, 1
      %p198 = por %p196, %p197
      %p199 = scmp.ne.s32.totalorder %s190, %s191
      %p200 = scmp.eq.s32.totalorder %s28, 0
      %p201 = por %p199, %p200
      %p202 = scmp.ne.s32.totalorder %s190, %s191
      %p203 = scmp.eq.s32.totalorder %s29, 1
      %p204 = por %p202, %p203
      %p206 = scmp.ne.s32.totalorder %s191, %s205
      %p207 = scmp.eq.s32.totalorder %s29, 0
      %p208 = por %p206, %p207
      %s210 = sadd.s32 %s209, 1
      %p213 = scmp.eq.s32.totalorder %s23, 1
      %p214 = scmp.ne.s32.totalorder %s209, %s211
      %p215 = scmp.eq.s32.totalorder %s23, 0
      %p216 = por %p214, %p215
      %p217 = scmp.ne.s32.totalorder %s209, %s211
      %p218 = scmp.eq.s32.totalorder %s28, 1
      %p219 = por %p217, %p218
      %p220 = scmp.ne.s32.totalorder %s211, %s212
      %p221 = scmp.eq.s32.totalorder %s28, 0
      %p222 = por %p220, %p221
      %p223 = scmp.ne.s32.totalorder %s211, %s212
      %p224 = scmp.eq.s32.totalorder %s29, 1
      %p225 = por %p223, %p224
      %p227 = scmp.ne.s32.totalorder %s212, %s226
      %p228 = scmp.eq.s32.totalorder %s29, 0
      %p229 = por %p227, %p228
      %s231 = sadd.s32 %s230, 1
      %p234 = scmp.eq.s32.totalorder %s23, 1
      %p235 = scmp.ne.s32.totalorder %s230, %s232
      %p236 = scmp.eq.s32.totalorder %s23, 0
      %p237 = por %p235, %p236
      %p238 = scmp.ne.s32.totalorder %s230, %s232
      %p239 = scmp.eq.s32.totalorder %s28, 1
      %p240 = por %p238, %p239
      %p241 = scmp.ne.s32.totalorder %s232, %s233
      %p242 = scmp.eq.s32.totalorder %s28, 0
      %p243 = por %p241, %p242
      %p244 = scmp.ne.s32.totalorder %s232, %s233
      %p245 = scmp.eq.s32.totalorder %s29, 1
      %p246 = por %p244, %p245
      %p248 = scmp.ne.s32.totalorder %s233, %s247
      %p249 = scmp.eq.s32.totalorder %s29, 0
      %p250 = por %p248, %p249
      %s251 = ssub.s32 %s23, %s30
      %p252 = scmp.eq.s32.totalorder %s251, 0
      %s254 = sadd.s32 %s253, 1
      %s255 = scalar_select %p252, %s253, %s254
      %p258 = pneg %p252
      %p259 = scmp.eq.s32.totalorder %s23, 1
      %p260 = por %p258, %p259
      %p261 = scmp.ne.s32.totalorder %s253, %s256
      %p262 = scmp.eq.s32.totalorder %s23, 0
      %p263 = por %p261, %p262
      %p264 = scmp.ne.s32.totalorder %s253, %s256
      %p265 = scmp.eq.s32.totalorder %s28, 1
      %p266 = por %p264, %p265
      %p267 = scmp.ne.s32.totalorder %s256, %s257
      %p268 = scmp.eq.s32.totalorder %s28, 0
      %p269 = por %p267, %p268
      %p270 = scmp.ne.s32.totalorder %s256, %s257
      %p271 = scmp.eq.s32.totalorder %s29, 1
      %p272 = por %p270, %p271
      %p274 = scmp.ne.s32.totalorder %s257, %s273
      %p275 = scmp.eq.s32.totalorder %s29, 0
      %p276 = por %p274, %p275
      %s277 = ssub.s32 %s23, %s30
      %p278 = scmp.eq.s32.totalorder %s277, 0
      %s280 = sadd.s32 %s279, 1
      %s281 = scalar_select %p278, %s279, %s280
      %p284 = pneg %p278
      %p285 = scmp.eq.s32.totalorder %s23, 1
      %p286 = por %p284, %p285
      %p287 = scmp.ne.s32.totalorder %s279, %s282
      %p288 = scmp.eq.s32.totalorder %s23, 0
      %p289 = por %p287, %p288
      %p290 = scmp.ne.s32.totalorder %s279, %s282
      %p291 = scmp.eq.s32.totalorder %s28, 1
      %p292 = por %p290, %p291
      %p293 = scmp.ne.s32.totalorder %s282, %s283
      %p294 = scmp.eq.s32.totalorder %s28, 0
      %p295 = por %p293, %p294
      %p296 = scmp.ne.s32.totalorder %s282, %s283
      %p297 = scmp.eq.s32.totalorder %s29, 1
      %p298 = por %p296, %p297
      %p300 = scmp.ne.s32.totalorder %s283, %s299
      %p301 = scmp.eq.s32.totalorder %s29, 0
      %p302 = por %p300, %p301
      %p303 = scmp.le.s32.totalorder 1, %s23
      %p304 = scmp.lt.s32.totalorder %s23, 3
      %p305 = pnand %p303, %p304
      %p306 = pneg %p305
      // Predicated region
      $region9: #{vae_forward.1} parent=5 // pred_check
        _
      $region10: #{vae_forward.1} parent=5 // pred_check_branch
        %308 = sbr.rel (%p305) target = $region12
      $region11: #{vae_forward.1} parent=5 // pred_region
        %s309 = ssub.s32 %s23, 1
        // Predicated region
        $region13: #{vae_forward.1} parent=11 // pred_check
          %p310 = pneg %p96
        $region14: #{vae_forward.1} parent=11 // pred_check_branch
          %312 = sbr.rel (%p310) target = $region16
        $region15: #{vae_forward.1} parent=11 // pred_region
          %s314 = ssub.s32 2048, 2048
          %315 = vsyncadd [#allocation3], %s314
          %s316 = sshll.u32 [#allocation2], 4
          %s317 = int_to_ptr.vmem [resolvable:$true] %s316
          %322 = dma.hbm_to_vmem [thread:$0]  %s2, 2048, %s317, [#allocation3], 64, 64, 4
        $region16: #{vae_forward.1} parent=11 // pred_fallthru
          _
        // Predicated region
        $region17: #{vae_forward.1} parent=11 // pred_check
          %p323 = pneg %p117
        $region18: #{vae_forward.1} parent=11 // pred_check_branch
          %325 = sbr.rel (%p323) target = $region20
        $region19: #{vae_forward.1} parent=11 // pred_region
          _
        $region20: #{vae_forward.1} parent=11 // pred_fallthru
          _
        // Predicated region
        $region21: #{vae_forward.1} parent=11 // pred_check
          %p326 = pneg %p138
        $region22: #{vae_forward.1} parent=11 // pred_check_branch
          %328 = sbr.rel (%p326) target = $region24
        $region23: #{vae_forward.1} parent=11 // pred_region
          %s330 = ssub.s32 2048, 2048
          %331 = vsyncadd [#allocation6], %s330
          %s332 = sshll.u32 [#allocation5], 4
          %s333 = int_to_ptr.vmem [resolvable:$true] %s332
          %338 = dma.hbm_to_vmem [thread:$0]  %s4, 2048, %s333, [#allocation6], 128, 128, 8
        $region24: #{vae_forward.1} parent=11 // pred_fallthru
          _
        // Predicated region
        $region25: #{vae_forward.1} parent=11 // pred_check
          %p339 = pneg %p159
        $region26: #{vae_forward.1} parent=11 // pred_check_branch
          %341 = sbr.rel (%p339) target = $region28
        $region27: #{vae_forward.1} parent=11 // pred_region
          _
        $region28: #{vae_forward.1} parent=11 // pred_fallthru
          _
        // Predicated region
        $region29: #{vae_forward.1} parent=11 // pred_check
          %p342 = pneg %p180
        $region30: #{vae_forward.1} parent=11 // pred_check_branch
          %344 = sbr.rel (%p342) target = $region32
        $region31: #{vae_forward.1} parent=11 // pred_region
          _
        $region32: #{vae_forward.1} parent=11 // pred_fallthru
          _
        // Predicated region
        $region33: #{vae_forward.1} parent=11 // pred_check
          %p345 = pneg %p201
        $region34: #{vae_forward.1} parent=11 // pred_check_branch
          %347 = sbr.rel (%p345) target = $region36
        $region35: #{vae_forward.1} parent=11 // pred_region
          _
        $region36: #{vae_forward.1} parent=11 // pred_fallthru
          _
        // Predicated region
        $region37: #{vae_forward.1} parent=11 // pred_check
          %p348 = pneg %p222
        $region38: #{vae_forward.1} parent=11 // pred_check_branch
          %350 = sbr.rel (%p348) target = $region40
        $region39: #{vae_forward.1} parent=11 // pred_region
          %s352 = ssub.s32 2048, 2048
          %353 = vsyncadd [#allocation6], %s352
          %s354 = sshll.u32 [#allocation7], 4
          %s355 = int_to_ptr.vmem [resolvable:$true] %s354
          %360 = dma.hbm_to_vmem [thread:$0]  %s8, 2048, %s355, [#allocation6], 128, 128, 8
        $region40: #{vae_forward.1} parent=11 // pred_fallthru
          _
        // Predicated region
        $region41: #{vae_forward.1} parent=11 // pred_check
          %p361 = pneg %p243
        $region42: #{vae_forward.1} parent=11 // pred_check_branch
          %363 = sbr.rel (%p361) target = $region44
        $region43: #{vae_forward.1} parent=11 // pred_region
          _
        $region44: #{vae_forward.1} parent=11 // pred_fallthru
          _
      $region12: #{vae_forward.1} parent=5 // pred_fallthru
        _
      %p364 = scmp.lt.s32.totalorder %s23, 2
      // Predicated region
      $region45: #{vae_forward.1} parent=5 // pred_check
        %p365 = pneg %p364
      $region46: #{vae_forward.1} parent=5 // pred_check_branch
        %367 = sbr.rel (%p365) target = $region48
      $region47: #{vae_forward.1} parent=5 // pred_region
        // Predicated region
        $region49: #{vae_forward.1} parent=47 // pred_check
          %p368 = pneg %p43
        $region50: #{vae_forward.1} parent=47 // pred_check_branch
          %370 = sbr.rel (%p368) target = $region52
        $region51: #{vae_forward.1} parent=47 // pred_region
          %p371 = scmp.lt.s32.totalorder %s23, 1
          %s372 = scalar_select %p371, %s23, 1
          %s373 = smul.addr %s372, 2
          %s374 = smul.addr %s373, 4
          %s375 = scalar_lea.vmem %s0, %s374
        $region52: #{vae_forward.1} parent=47 // pred_fallthru
          _
        // Predicated region
        $region53: #{vae_forward.1} parent=47 // pred_check
          %p376 = pneg %p69
        $region54: #{vae_forward.1} parent=47 // pred_check_branch
          %378 = sbr.rel (%p376) target = $region56
        $region55: #{vae_forward.1} parent=47 // pred_region
          %p379 = scmp.lt.s32.totalorder %s23, 1
          %s380 = scalar_select %p379, %s23, 1
          %s381 = smul.addr %s380, 8
          %s382 = scalar_lea.vmem %s1, %s381
        $region56: #{vae_forward.1} parent=47 // pred_fallthru
          _
      $region48: #{vae_forward.1} parent=5 // pred_fallthru
        _
      %p383 = scmp.le.s32.totalorder 1, %s23
      %p384 = scmp.lt.s32.totalorder %s23, 3
      %p385 = pnand %p383, %p384
      %p386 = pneg %p385
      // Predicated region
      $region57: #{vae_forward.1} parent=5 // pred_check
        _
      $region58: #{vae_forward.1} parent=5 // pred_check_branch
        %388 = sbr.rel (%p385) target = $region60
      $region59: #{vae_forward.1} parent=5 // pred_region
        %s389 = ssub.s32 %s23, 1
        // Predicated region
        $region61: #{vae_forward.1} parent=59 // pred_check
          %p390 = pneg %p96
        $region62: #{vae_forward.1} parent=59 // pred_check_branch
          %392 = sbr.rel (%p390) target = $region64
        $region63: #{vae_forward.1} parent=59 // pred_region
          %393 = dma.done [#allocation3], 2048
        $region64: #{vae_forward.1} parent=59 // pred_fallthru
          _
        // Predicated region
        $region65: #{vae_forward.1} parent=59 // pred_check
          %p394 = pneg %p138
        $region66: #{vae_forward.1} parent=59 // pred_check_branch
          %396 = sbr.rel (%p394) target = $region68
        $region67: #{vae_forward.1} parent=59 // pred_region
          %397 = dma.done [#allocation6], 2048
        $region68: #{vae_forward.1} parent=59 // pred_fallthru
          _
        // Predicated region
        $region69: #{vae_forward.1} parent=59 // pred_check
          %p398 = pneg %p222
        $region70: #{vae_forward.1} parent=59 // pred_check_branch
          %400 = sbr.rel (%p398) target = $region72
        $region71: #{vae_forward.1} parent=59 // pred_region
          %401 = dma.done [#allocation6], 2048
        $region72: #{vae_forward.1} parent=59 // pred_fallthru
          _
        %p402 = scmp.lt.s32.totalorder %s28, 1
        %s403 = scalar_select %p402, %s28, 1
        %s404 = smul.addr %s403, 2
        %s405 = smul.addr %s404, 4
        %s406 = scalar_lea.vmem %s0, %s405
        %p407 = pneg %p49
        %p408 = pneg %p46
        %p409 = scmp.lt.s32.totalorder %s28, 1
        %s410 = scalar_select %p409, %s28, 1
        %s411 = smul.addr %s410, 8
        %s412 = scalar_lea.vmem %s1, %s411
        %p413 = pneg %p75
        %p414 = pneg %p72
        %p415 = pneg %p96
        %p416 = pneg %p93
        %p417 = pneg %p117
        %p418 = pneg %p114
        %p419 = pneg %p138
        %p420 = pneg %p135
        %p421 = pneg %p159
        %p422 = pneg %p156
        %p423 = pneg %p180
        %p424 = pneg %p177
        %p425 = pneg %p201
        %p426 = pneg %p198
        %p427 = pneg %p222
        %p428 = pneg %p219
        %p429 = pneg %p243
        %p430 = pneg %p240
        %p431 = pneg %p269
        %p432 = pneg %p266
        %s433 = sand.u32 %s256, 1
        %s434 = scalar_lea.sflag [#allocation4], %s433
        %s435 = sand.u32 %s256, 1
        %s436 = smul.addr %s435, 8
        %s437 = scalar_lea.vmem [#allocation8], %s436
        %p438 = pneg %p295
        %p439 = pneg %p292
        %p440 = scmp.lt.s32.totalorder %s28, 1
        %s441 = scalar_select %p440, %s28, 1
        %s442 = smul.addr %s441, 2
        %s443 = smul.addr %s442, 8
        %s444 = scalar_lea.vmem %s11, %s443
        %p445 = scmp.lt.s32.totalorder %s28, 1
        %s446 = scalar_select %p445, %s28, 1
        %s447 = smul.addr %s446, 2
        %s448 = smul.addr %s447, 4
        %s449 = scalar_lea.vmem %s0, %s448
        %p450 = scmp.lt.s32.totalorder %s28, 1
        %s451 = scalar_select %p450, %s28, 1
        %s452 = smul.addr %s451, 8
        %s453 = scalar_lea.vmem %s1, %s452
        %p454 = scmp.lt.s32.totalorder %s28, 1
        %s455 = scalar_select %p454, %s28, 1
        %s456 = smul.addr %s455, 2
        %s457 = smul.addr %s456, 8
        %s458 = scalar_lea.vmem %s11, %s457
        %v460 = vld [vmem:[%s449] sm:$0xff]
        %v461 = vld [vmem:[#allocation2] sm:$0xf]
        %v462 = vld [vmem:[#allocation2 + $0x4] sm:$0xf]
        %v463 = vld [vmem:[#allocation2 + $0x8] sm:$0xf]
        %v464 = vld [vmem:[#allocation2 + $0xc] sm:$0xf]
        %v465 = vld [vmem:[#allocation2 + $0x10] sm:$0xf]
        %v466 = vld [vmem:[#allocation2 + $0x14] sm:$0xf]
        %v467 = vld [vmem:[#allocation2 + $0x18] sm:$0xf]
        %v468 = vld [vmem:[#allocation2 + $0x1c] sm:$0xf]
        %v469 = vld [vmem:[#allocation2 + $0x20] sm:$0xf]
        %v470 = vld [vmem:[#allocation2 + $0x24] sm:$0xf]
        %v471 = vld [vmem:[#allocation2 + $0x28] sm:$0xf]
        %v472 = vld [vmem:[#allocation2 + $0x2c] sm:$0xf]
        %v473 = vld [vmem:[#allocation2 + $0x30] sm:$0xf]
        %v474 = vld [vmem:[#allocation2 + $0x34] sm:$0xf]
        %v475 = vld [vmem:[#allocation2 + $0x38] sm:$0xf]
        %v476 = vld [vmem:[#allocation2 + $0x3c] sm:$0xf]
        %v477 = vld [vmem:[#allocation2 + $0x40] sm:$0xf]
        %v478 = vld [vmem:[#allocation2 + $0x44] sm:$0xf]
        %v479 = vld [vmem:[#allocation2 + $0x48] sm:$0xf]
        %v480 = vld [vmem:[#allocation2 + $0x4c] sm:$0xf]
        %v481 = vld [vmem:[#allocation2 + $0x50] sm:$0xf]
        %v482 = vld [vmem:[#allocation2 + $0x54] sm:$0xf]
        %v483 = vld [vmem:[#allocation2 + $0x58] sm:$0xf]
        %v484 = vld [vmem:[#allocation2 + $0x5c] sm:$0xf]
        %v485 = vld [vmem:[#allocation2 + $0x60] sm:$0xf]
        %v486 = vld [vmem:[#allocation2 + $0x64] sm:$0xf]
        %v487 = vld [vmem:[#allocation2 + $0x68] sm:$0xf]
        %v488 = vld [vmem:[#allocation2 + $0x6c] sm:$0xf]
        %v489 = vld [vmem:[#allocation2 + $0x70] sm:$0xf]
        %v490 = vld [vmem:[#allocation2 + $0x74] sm:$0xf]
        %v491 = vld [vmem:[#allocation2 + $0x78] sm:$0xf]
        %v492 = vld [vmem:[#allocation2 + $0x7c] sm:$0xf]
        %v493 = vld [vmem:[%s3] sm:$0x1]
        %v495 = vlaneseq
        %v496 = vshrl.u32 %v495, 7
        %v497 = vsub.s32 0, %v496
        %v498 = vrot.slane %v493, %v497
        %v501 = vunpack.c.l.b16 %v460
        %v502 = vunpack.c.h.b16 %v460
        %v503 = vpack.c.b16 %v501, %v501
        %v504 = vpack.c.b16 %v502, %v502
        %v539 = vunpack.c.l.b16 %v461
        %v540 = vunpack.c.l.b16 %v462
        %v541 = vunpack.c.l.b16 %v463
        %v542 = vunpack.c.l.b16 %v464
        %v543 = vunpack.c.l.b16 %v465
        %v544 = vunpack.c.l.b16 %v466
        %v545 = vunpack.c.l.b16 %v467
        %v546 = vunpack.c.l.b16 %v468
        %v547 = vunpack.c.l.b16 %v469
        %v548 = vunpack.c.l.b16 %v470
        %v549 = vunpack.c.l.b16 %v471
        %v550 = vunpack.c.l.b16 %v472
        %v551 = vunpack.c.l.b16 %v473
        %v552 = vunpack.c.l.b16 %v474
        %v553 = vunpack.c.l.b16 %v475
        %v554 = vunpack.c.l.b16 %v476
        %v555 = vunpack.c.l.b16 %v477
        %v556 = vunpack.c.l.b16 %v478
        %v557 = vunpack.c.l.b16 %v479
        %v558 = vunpack.c.l.b16 %v480
        %v559 = vunpack.c.l.b16 %v481
        %v560 = vunpack.c.l.b16 %v482
        %v561 = vunpack.c.l.b16 %v483
        %v562 = vunpack.c.l.b16 %v484
        %v563 = vunpack.c.l.b16 %v485
        %v564 = vunpack.c.l.b16 %v486
        %v565 = vunpack.c.l.b16 %v487
        %v566 = vunpack.c.l.b16 %v488
        %v567 = vunpack.c.l.b16 %v489
        %v568 = vunpack.c.l.b16 %v490
        %v569 = vunpack.c.l.b16 %v491
        %v570 = vunpack.c.l.b16 %v492
        %v571 = vpack.c.b16 %v540, %v539
        %v572 = vpack.c.b16 %v542, %v541
        %v573 = vpack.c.b16 %v544, %v543
        %v574 = vpack.c.b16 %v546, %v545
        %v575 = vpack.c.b16 %v548, %v547
        %v576 = vpack.c.b16 %v550, %v549
        %v577 = vpack.c.b16 %v552, %v551
        %v578 = vpack.c.b16 %v554, %v553
        %v579 = vpack.c.b16 %v556, %v555
        %v580 = vpack.c.b16 %v558, %v557
        %v581 = vpack.c.b16 %v560, %v559
        %v582 = vpack.c.b16 %v562, %v561
        %v583 = vpack.c.b16 %v564, %v563
        %v584 = vpack.c.b16 %v566, %v565
        %v585 = vpack.c.b16 %v568, %v567
        %v586 = vpack.c.b16 %v570, %v569
        %603 = vmatprep.subr.bf16.mxu0 0
        %604 = vmatpush1.bf16.msra.mxu0 %v571
        %605 = vmatprep.subr.bf16.mxu0 0
        %606 = vmatpush1.bf16.msra.mxu0 %v572
        %607 = vmatprep.subr.bf16.mxu0 0
        %608 = vmatpush1.bf16.msra.mxu0 %v573
        %609 = vmatprep.subr.bf16.mxu0 0
        %610 = vmatpush1.bf16.msra.mxu0 %v574
        %611 = vmatprep.subr.bf16.mxu0 0
        %612 = vmatpush1.bf16.msra.mxu0 %v575
        %613 = vmatprep.subr.bf16.mxu0 0
        %614 = vmatpush1.bf16.msra.mxu0 %v576
        %615 = vmatprep.subr.bf16.mxu0 0
        %616 = vmatpush1.bf16.msra.mxu0 %v577
        %617 = vmatprep.subr.bf16.mxu0 0
        %618 = vmatpush1.bf16.msra.mxu0 %v578
        %619 = vmatprep.subr.bf16.mxu0 0
        %620 = vmatpush1.bf16.msra.mxu0 %v579
        %621 = vmatprep.subr.bf16.mxu0 0
        %622 = vmatpush1.bf16.msra.mxu0 %v580
        %623 = vmatprep.subr.bf16.mxu0 0
        %624 = vmatpush1.bf16.msra.mxu0 %v581
        %625 = vmatprep.subr.bf16.mxu0 0
        %626 = vmatpush1.bf16.msra.mxu0 %v582
        %627 = vmatprep.subr.bf16.mxu0 0
        %628 = vmatpush1.bf16.msra.mxu0 %v583
        %629 = vmatprep.subr.bf16.mxu0 0
        %630 = vmatpush1.bf16.msra.mxu0 %v584
        %631 = vmatprep.subr.bf16.mxu0 0
        %632 = vmatpush1.bf16.msra.mxu0 %v585
        %633 = vmatprep.subr.bf16.mxu0 0
        %634 = vmatpush1.bf16.msra.mxu0 %v586
        %635 = vmatprep.mubr.bf16.mxu0 %v504
        %636 = vmatmul.mubr.bf16.gmra.mrb[0].mxu0 %v503
        %v637 = vpop.f32.mrb[0].mxu0
        %v638 = vadd.f32 %v498, %v637
        %v639 = vpop.f32.mrb[0].mxu0
        %v640 = vpop.f32.mrb[0].mxu0
        %v641 = vpop.f32.mrb[0].mxu0
        %642 = vdwg.mxu0
        %v643 = vmax.f32 %v638, 0.0
        %v644 = vpack.c.bf16 %v643, %v643
        %v645 = vld [vmem:[#allocation5] sm:$0xff]
        %v646 = vld [vmem:[#allocation5 + $0x8] sm:$0xff]
        %v647 = vld [vmem:[#allocation5 + $0x10] sm:$0xff]
        %v648 = vld [vmem:[#allocation5 + $0x18] sm:$0xff]
        %v649 = vld [vmem:[#allocation5 + $0x20] sm:$0xff]
        %v650 = vld [vmem:[#allocation5 + $0x28] sm:$0xff]
        %v651 = vld [vmem:[#allocation5 + $0x30] sm:$0xff]
        %v652 = vld [vmem:[#allocation5 + $0x38] sm:$0xff]
        %v653 = vld [vmem:[#allocation5 + $0x40] sm:$0xff]
        %v654 = vld [vmem:[#allocation5 + $0x48] sm:$0xff]
        %v655 = vld [vmem:[#allocation5 + $0x50] sm:$0xff]
        %v656 = vld [vmem:[#allocation5 + $0x58] sm:$0xff]
        %v657 = vld [vmem:[#allocation5 + $0x60] sm:$0xff]
        %v658 = vld [vmem:[#allocation5 + $0x68] sm:$0xff]
        %v659 = vld [vmem:[#allocation5 + $0x70] sm:$0xff]
        %v660 = vld [vmem:[#allocation5 + $0x78] sm:$0xff]
        %v661 = vld [vmem:[%s5] sm:$0x3]
        %v663 = vlaneseq
        %v664 = vshrl.u32 %v663, 7
        %v665 = vsub.s32 0, %v664
        %v666 = vrot.slane %v661, %v665
        %v667 = vlaneseq
        %v668 = vshrl.u32 %v667, 7
        %v669 = vsub.s32 1, %v668
        %v670 = vrot.slane %v661, %v669
        %v689 = vunpack.c.l.b16 %v645
        %v690 = vunpack.c.h.b16 %v645
        %v691 = vunpack.c.l.b16 %v646
        %v692 = vunpack.c.h.b16 %v646
        %v693 = vunpack.c.l.b16 %v647
        %v694 = vunpack.c.h.b16 %v647
        %v695 = vunpack.c.l.b16 %v648
        %v696 = vunpack.c.h.b16 %v648
        %v697 = vunpack.c.l.b16 %v649
        %v698 = vunpack.c.h.b16 %v649
        %v699 = vunpack.c.l.b16 %v650
        %v700 = vunpack.c.h.b16 %v650
        %v701 = vunpack.c.l.b16 %v651
        %v702 = vunpack.c.h.b16 %v651
        %v703 = vunpack.c.l.b16 %v652
        %v704 = vunpack.c.h.b16 %v652
        %v705 = vunpack.c.l.b16 %v653
        %v706 = vunpack.c.h.b16 %v653
        %v707 = vunpack.c.l.b16 %v654
        %v708 = vunpack.c.h.b16 %v654
        %v709 = vunpack.c.l.b16 %v655
        %v710 = vunpack.c.h.b16 %v655
        %v711 = vunpack.c.l.b16 %v656
        %v712 = vunpack.c.h.b16 %v656
        %v713 = vunpack.c.l.b16 %v657
        %v714 = vunpack.c.h.b16 %v657
        %v715 = vunpack.c.l.b16 %v658
        %v716 = vunpack.c.h.b16 %v658
        %v717 = vunpack.c.l.b16 %v659
        %v718 = vunpack.c.h.b16 %v659
        %v719 = vunpack.c.l.b16 %v660
        %v720 = vunpack.c.h.b16 %v660
        %v721 = vpack.c.b16 %v691, %v689
        %v722 = vpack.c.b16 %v692, %v690
        %v723 = vpack.c.b16 %v695, %v693
        %v724 = vpack.c.b16 %v696, %v694
        %v725 = vpack.c.b16 %v699, %v697
        %v726 = vpack.c.b16 %v700, %v698
        %v727 = vpack.c.b16 %v703, %v701
        %v728 = vpack.c.b16 %v704, %v702
        %v729 = vpack.c.b16 %v707, %v705
        %v730 = vpack.c.b16 %v708, %v706
        %v731 = vpack.c.b16 %v711, %v709
        %v732 = vpack.c.b16 %v712, %v710
        %v733 = vpack.c.b16 %v715, %v713
        %v734 = vpack.c.b16 %v716, %v714
        %v735 = vpack.c.b16 %v719, %v717
        %v736 = vpack.c.b16 %v720, %v718
        %753 = vmatprep.subr.bf16.mxu0 %v722
        %754 = vmatpush1.bf16.msra.mxu0 %v721
        %755 = vmatprep.subr.bf16.mxu0 %v724
        %756 = vmatpush1.bf16.msra.mxu0 %v723
        %757 = vmatprep.subr.bf16.mxu0 %v726
        %758 = vmatpush1.bf16.msra.mxu0 %v725
        %759 = vmatprep.subr.bf16.mxu0 %v728
        %760 = vmatpush1.bf16.msra.mxu0 %v727
        %761 = vmatprep.subr.bf16.mxu0 %v730
        %762 = vmatpush1.bf16.msra.mxu0 %v729
        %763 = vmatprep.subr.bf16.mxu0 %v732
        %764 = vmatpush1.bf16.msra.mxu0 %v731
        %765 = vmatprep.subr.bf16.mxu0 %v734
        %766 = vmatpush1.bf16.msra.mxu0 %v733
        %767 = vmatprep.subr.bf16.mxu0 %v736
        %768 = vmatpush1.bf16.msra.mxu0 %v735
        %769 = vmatprep.subr.bf16.mxu0 0
        %770 = vmatpush1.bf16.msra.mxu0 0
        %771 = vmatprep.subr.bf16.mxu0 0
        %772 = vmatpush1.bf16.msra.mxu0 0
        %773 = vmatprep.subr.bf16.mxu0 0
        %774 = vmatpush1.bf16.msra.mxu0 0
        %775 = vmatprep.subr.bf16.mxu0 0
        %776 = vmatpush1.bf16.msra.mxu0 0
        %777 = vmatprep.subr.bf16.mxu0 0
        %778 = vmatpush1.bf16.msra.mxu0 0
        %779 = vmatprep.subr.bf16.mxu0 0
        %780 = vmatpush1.bf16.msra.mxu0 0
        %781 = vmatprep.subr.bf16.mxu0 0
        %782 = vmatpush1.bf16.msra.mxu0 0
        %783 = vmatprep.subr.bf16.mxu0 0
        %784 = vmatpush1.bf16.msra.mxu0 0
        %785 = vmatprep.mubr.bf16.mxu0 0
        %786 = vmatmul.mubr.bf16.gmra.mrb[0].mxu0 %v644
        %v787 = vpop.f32.mrb[0].mxu0
        %v788 = vadd.f32 %v666, %v787
        %v789 = vpop.f32.mrb[0].mxu0
        %v790 = vadd.f32 %v670, %v789
        %v791 = vpop.f32.mrb[0].mxu0
        %v792 = vpop.f32.mrb[0].mxu0
        %793 = vdwg.mxu0
        %v794 = vld [vmem:[%s453] sm:$0xff]
        %v795 = vmul.f32 %v790, %v794
        %v796 = vadd.f32 %v788, %v795
        %v797 = vpack.c.bf16 %v796, %v796
        %v798 = vld [vmem:[%s6] sm:$0xf]
        %v799 = vld [vmem:[%s6 + $0x4] sm:$0xf]
        %v800 = vld [vmem:[%s6 + $0x8] sm:$0xf]
        %v801 = vld [vmem:[%s6 + $0xc] sm:$0xf]
        %v802 = vld [vmem:[%s6 + $0x10] sm:$0xf]
        %v803 = vld [vmem:[%s6 + $0x14] sm:$0xf]
        %v804 = vld [vmem:[%s6 + $0x18] sm:$0xf]
        %v805 = vld [vmem:[%s6 + $0x1c] sm:$0xf]
        %v806 = vld [vmem:[%s6 + $0x20] sm:$0xf]
        %v807 = vld [vmem:[%s6 + $0x24] sm:$0xf]
        %v808 = vld [vmem:[%s6 + $0x28] sm:$0xf]
        %v809 = vld [vmem:[%s6 + $0x2c] sm:$0xf]
        %v810 = vld [vmem:[%s6 + $0x30] sm:$0xf]
        %v811 = vld [vmem:[%s6 + $0x34] sm:$0xf]
        %v812 = vld [vmem:[%s6 + $0x38] sm:$0xf]
        %v813 = vld [vmem:[%s6 + $0x3c] sm:$0xf]
        %v814 = vld [vmem:[%s7] sm:$0x1]
        %v816 = vlaneseq
        %v817 = vshrl.u32 %v816, 7
        %v818 = vsub.s32 0, %v817
        %v819 = vrot.slane %v814, %v818
        %v837 = vunpack.c.l.b16 %v798
        %v838 = vunpack.c.l.b16 %v799
        %v839 = vunpack.c.l.b16 %v800
        %v840 = vunpack.c.l.b16 %v801
        %v841 = vunpack.c.l.b16 %v802
        %v842 = vunpack.c.l.b16 %v803
        %v843 = vunpack.c.l.b16 %v804
        %v844 = vunpack.c.l.b16 %v805
        %v845 = vunpack.c.l.b16 %v806
        %v846 = vunpack.c.l.b16 %v807
        %v847 = vunpack.c.l.b16 %v808
        %v848 = vunpack.c.l.b16 %v809
        %v849 = vunpack.c.l.b16 %v810
        %v850 = vunpack.c.l.b16 %v811
        %v851 = vunpack.c.l.b16 %v812
        %v852 = vunpack.c.l.b16 %v813
        %v853 = vpack.c.b16 %v838, %v837
        %v854 = vpack.c.b16 %v840, %v839
        %v855 = vpack.c.b16 %v842, %v841
        %v856 = vpack.c.b16 %v844, %v843
        %v857 = vpack.c.b16 %v846, %v845
        %v858 = vpack.c.b16 %v848, %v847
        %v859 = vpack.c.b16 %v850, %v849
        %v860 = vpack.c.b16 %v852, %v851
        %869 = vmatprep.subr.bf16.mxu0 0
        %870 = vmatpush1.bf16.msra.mxu0 %v853
        %871 = vmatprep.subr.bf16.mxu0 0
        %872 = vmatpush1.bf16.msra.mxu0 %v854
        %873 = vmatprep.subr.bf16.mxu0 0
        %874 = vmatpush1.bf16.msra.mxu0 %v855
        %875 = vmatprep.subr.bf16.mxu0 0
        %876 = vmatpush1.bf16.msra.mxu0 %v856
        %877 = vmatprep.subr.bf16.mxu0 0
        %878 = vmatpush1.bf16.msra.mxu0 %v857
        %879 = vmatprep.subr.bf16.mxu0 0
        %880 = vmatpush1.bf16.msra.mxu0 %v858
        %881 = vmatprep.subr.bf16.mxu0 0
        %882 = vmatpush1.bf16.msra.mxu0 %v859
        %883 = vmatprep.subr.bf16.mxu0 0
        %884 = vmatpush1.bf16.msra.mxu0 %v860
        %885 = vmatprep.subr.bf16.mxu0 0
        %886 = vmatpush1.bf16.msra.mxu0 0
        %887 = vmatprep.subr.bf16.mxu0 0
        %888 = vmatpush1.bf16.msra.mxu0 0
        %889 = vmatprep.subr.bf16.mxu0 0
        %890 = vmatpush1.bf16.msra.mxu0 0
        %891 = vmatprep.subr.bf16.mxu0 0
        %892 = vmatpush1.bf16.msra.mxu0 0
        %893 = vmatprep.subr.bf16.mxu0 0
        %894 = vmatpush1.bf16.msra.mxu0 0
        %895 = vmatprep.subr.bf16.mxu0 0
        %896 = vmatpush1.bf16.msra.mxu0 0
        %897 = vmatprep.subr.bf16.mxu0 0
        %898 = vmatpush1.bf16.msra.mxu0 0
        %899 = vmatprep.subr.bf16.mxu0 0
        %900 = vmatpush1.bf16.msra.mxu0 0
        %901 = vmatprep.mubr.bf16.mxu0 0
        %902 = vmatmul.mubr.bf16.gmra.mrb[0].mxu0 %v797
        %v903 = vpop.f32.mrb[0].mxu0
        %v904 = vadd.f32 %v819, %v903
        %v905 = vpop.f32.mrb[0].mxu0
        %v906 = vpop.f32.mrb[0].mxu0
        %v907 = vpop.f32.mrb[0].mxu0
        %908 = vdwg.mxu0
        %v909 = vmax.f32 %v904, 0.0
        %v910 = vpack.c.bf16 %v909, %v909
        %v911 = vld [vmem:[#allocation7] sm:$0xff]
        %v912 = vld [vmem:[#allocation7 + $0x8] sm:$0xff]
        %v913 = vld [vmem:[#allocation7 + $0x10] sm:$0xff]
        %v914 = vld [vmem:[#allocation7 + $0x18] sm:$0xff]
        %v915 = vld [vmem:[#allocation7 + $0x20] sm:$0xff]
        %v916 = vld [vmem:[#allocation7 + $0x28] sm:$0xff]
        %v917 = vld [vmem:[#allocation7 + $0x30] sm:$0xff]
        %v918 = vld [vmem:[#allocation7 + $0x38] sm:$0xff]
        %v919 = vld [vmem:[#allocation7 + $0x40] sm:$0xff]
        %v920 = vld [vmem:[#allocation7 + $0x48] sm:$0xff]
        %v921 = vld [vmem:[#allocation7 + $0x50] sm:$0xff]
        %v922 = vld [vmem:[#allocation7 + $0x58] sm:$0xff]
        %v923 = vld [vmem:[#allocation7 + $0x60] sm:$0xff]
        %v924 = vld [vmem:[#allocation7 + $0x68] sm:$0xff]
        %v925 = vld [vmem:[#allocation7 + $0x70] sm:$0xff]
        %v926 = vld [vmem:[#allocation7 + $0x78] sm:$0xff]
        %v927 = vld [vmem:[%s9] sm:$0x3]
        %v929 = vlaneseq
        %v930 = vshrl.u32 %v929, 7
        %v931 = vsub.s32 0, %v930
        %v932 = vrot.slane %v927, %v931
        %v933 = vlaneseq
        %v934 = vshrl.u32 %v933, 7
        %v935 = vsub.s32 1, %v934
        %v936 = vrot.slane %v927, %v935
        %v955 = vunpack.c.l.b16 %v911
        %v956 = vunpack.c.h.b16 %v911
        %v957 = vunpack.c.l.b16 %v912
        %v958 = vunpack.c.h.b16 %v912
        %v959 = vunpack.c.l.b16 %v913
        %v960 = vunpack.c.h.b16 %v913
        %v961 = vunpack.c.l.b16 %v914
        %v962 = vunpack.c.h.b16 %v914
        %v963 = vunpack.c.l.b16 %v915
        %v964 = vunpack.c.h.b16 %v915
        %v965 = vunpack.c.l.b16 %v916
        %v966 = vunpack.c.h.b16 %v916
        %v967 = vunpack.c.l.b16 %v917
        %v968 = vunpack.c.h.b16 %v917
        %v969 = vunpack.c.l.b16 %v918
        %v970 = vunpack.c.h.b16 %v918
        %v971 = vunpack.c.l.b16 %v919
        %v972 = vunpack.c.h.b16 %v919
        %v973 = vunpack.c.l.b16 %v920
        %v974 = vunpack.c.h.b16 %v920
        %v975 = vunpack.c.l.b16 %v921
        %v976 = vunpack.c.h.b16 %v921
        %v977 = vunpack.c.l.b16 %v922
        %v978 = vunpack.c.h.b16 %v922
        %v979 = vunpack.c.l.b16 %v923
        %v980 = vunpack.c.h.b16 %v923
        %v981 = vunpack.c.l.b16 %v924
        %v982 = vunpack.c.h.b16 %v924
        %v983 = vunpack.c.l.b16 %v925
        %v984 = vunpack.c.h.b16 %v925
        %v985 = vunpack.c.l.b16 %v926
        %v986 = vunpack.c.h.b16 %v926
        %v987 = vpack.c.b16 %v957, %v955
        %v988 = vpack.c.b16 %v958, %v956
        %v989 = vpack.c.b16 %v961, %v959
        %v990 = vpack.c.b16 %v962, %v960
        %v991 = vpack.c.b16 %v965, %v963
        %v992 = vpack.c.b16 %v966, %v964
        %v993 = vpack.c.b16 %v969, %v967
        %v994 = vpack.c.b16 %v970, %v968
        %v995 = vpack.c.b16 %v973, %v971
        %v996 = vpack.c.b16 %v974, %v972
        %v997 = vpack.c.b16 %v977, %v975
        %v998 = vpack.c.b16 %v978, %v976
        %v999 = vpack.c.b16 %v981, %v979
        %v1000 = vpack.c.b16 %v982, %v980
        %v1001 = vpack.c.b16 %v985, %v983
        %v1002 = vpack.c.b16 %v986, %v984
        %1019 = vmatprep.subr.bf16.mxu0 %v988
        %1020 = vmatpush1.bf16.msra.mxu0 %v987
        %1021 = vmatprep.subr.bf16.mxu0 %v990
        %1022 = vmatpush1.bf16.msra.mxu0 %v989
        %1023 = vmatprep.subr.bf16.mxu0 %v992
        %1024 = vmatpush1.bf16.msra.mxu0 %v991
        %1025 = vmatprep.subr.bf16.mxu0 %v994
        %1026 = vmatpush1.bf16.msra.mxu0 %v993
        %1027 = vmatprep.subr.bf16.mxu0 %v996
        %1028 = vmatpush1.bf16.msra.mxu0 %v995
        %1029 = vmatprep.subr.bf16.mxu0 %v998
        %1030 = vmatpush1.bf16.msra.mxu0 %v997
        %1031 = vmatprep.subr.bf16.mxu0 %v1000
        %1032 = vmatpush1.bf16.msra.mxu0 %v999
        %1033 = vmatprep.subr.bf16.mxu0 %v1002
        %1034 = vmatpush1.bf16.msra.mxu0 %v1001
        %1035 = vmatprep.subr.bf16.mxu0 0
        %1036 = vmatpush1.bf16.msra.mxu0 0
        %1037 = vmatprep.subr.bf16.mxu0 0
        %1038 = vmatpush1.bf16.msra.mxu0 0
        %1039 = vmatprep.subr.bf16.mxu0 0
        %1040 = vmatpush1.bf16.msra.mxu0 0
        %1041 = vmatprep.subr.bf16.mxu0 0
        %1042 = vmatpush1.bf16.msra.mxu0 0
        %1043 = vmatprep.subr.bf16.mxu0 0
        %1044 = vmatpush1.bf16.msra.mxu0 0
        %1045 = vmatprep.subr.bf16.mxu0 0
        %1046 = vmatpush1.bf16.msra.mxu0 0
        %1047 = vmatprep.subr.bf16.mxu0 0
        %1048 = vmatpush1.bf16.msra.mxu0 0
        %1049 = vmatprep.subr.bf16.mxu0 0
        %1050 = vmatpush1.bf16.msra.mxu0 0
        %1051 = vmatprep.mubr.bf16.mxu0 0
        %1052 = vmatmul.mubr.bf16.gmra.mrb[0].mxu0 %v910
        %v1053 = vpop.f32.mrb[0].mxu0
        %v1054 = vadd.f32 %v932, %v1053
        %v1055 = vpop.f32.mrb[0].mxu0
        %v1056 = vadd.f32 %v936, %v1055
        %v1057 = vpop.f32.mrb[0].mxu0
        %v1058 = vpop.f32.mrb[0].mxu0
        %1059 = vdwg.mxu0
        %v1060 = vxor.u32 %v1054, 2147483648
        %v1061 = vxor.u32 %v1056, 2147483648
        %v1062 = vmul.f32 %v1060, 1.442695
        %v1063 = vpow.pop %v1062
        %v1064 = vmul.f32 %v1061, 1.442695
        %v1065 = vpow.pop %v1064
        %v1066 = vadd.f32 %v1063, 1.0
        %v1067 = vadd.f32 %v1065, 1.0
        %v1068 = vrcp.pop %v1066
        %v1069 = vmul.f32 1.0, %v1068
        %v1070 = vrcp.pop %v1067
        %v1071 = vmul.f32 1.0, %v1070
        %v1072 = vpack.c.bf16 %v1069, %v1069
        %v1073 = vpack.c.bf16 %v1071, %v1071
        %v1076 = vunpack.c.l.b16 %v1072
        %v1077 = vunpack.c.l.b16 %v1073
        %v1078 = vpack.c.b16 %v1077, %v1076
        %1080 = vst [vmem:[%s437] sm:$0xff] %v1078
        %1081 = vst [vmem:[%s458] sm:$0xff] %v788
        %1082 = vst [vmem:[%s458 + $0x8] sm:$0xff] %v790
        %s1083 = sand.u32 %s256, 1
        %s1084 = scalar_lea.sflag [#allocation4], %s1083
        %s1085 = sand.u32 %s256, 1
        %s1086 = smul.addr %s1085, 8
        %s1087 = scalar_lea.vmem [#allocation8], %s1086
        %p1088 = scmp.lt.s32.totalorder %s28, 1
        %s1089 = scalar_select %p1088, %s28, 1
        %s1090 = smul.addr %s1089, 2
        %s1091 = smul.addr %s1090, 8
        %s1092 = scalar_lea.vmem %s11, %s1091
        // Predicated region
        $region73: #{vae_forward.1} parent=59 // pred_check
          %p1093 = pneg %p266
        $region74: #{vae_forward.1} parent=59 // pred_check_branch
          %1095 = sbr.rel (%p1093) target = $region76
        $region75: #{vae_forward.1} parent=59 // pred_region
          %s1097 = ssub.s32 128, 128
          %1098 = vsyncadd %s1084, %s1097
          %s1099 = smul.addr %s28, 2
          %s1100 = smul.addr %s1099, 64
          %s1101 = scalar_lea.hbm %s10, %s1100
          %s1103 = sshll.u32 %s1087, 4
          %s1104 = int_to_ptr.vmem [resolvable:$true] %s1103
          %1106 = dma.vmem_to_hbm [thread:$0]  %s1104, 128, %s1101, %s1084
        $region76: #{vae_forward.1} parent=59 // pred_fallthru
          _
        // Predicated region
        $region77: #{vae_forward.1} parent=59 // pred_check
          %p1107 = pneg %p292
        $region78: #{vae_forward.1} parent=59 // pred_check_branch
          %1109 = sbr.rel (%p1107) target = $region80
        $region79: #{vae_forward.1} parent=59 // pred_region
          _
        $region80: #{vae_forward.1} parent=59 // pred_fallthru
          _
      $region60: #{vae_forward.1} parent=5 // pred_fallthru
        _
      %p1110 = scmp.le.s32.totalorder 2, %s23
      // Predicated region
      $region81: #{vae_forward.1} parent=5 // pred_check
        %p1111 = pneg %p1110
      $region82: #{vae_forward.1} parent=5 // pred_check_branch
        %1113 = sbr.rel (%p1111) target = $region84
      $region83: #{vae_forward.1} parent=5 // pred_region
        %s1114 = ssub.s32 %s23, 2
        // Predicated region
        $region85: #{vae_forward.1} parent=83 // pred_check
          %p1115 = pneg %p272
        $region86: #{vae_forward.1} parent=83 // pred_check_branch
          %1117 = sbr.rel (%p1115) target = $region88
        $region87: #{vae_forward.1} parent=83 // pred_region
          %s1118 = sand.u32 %s257, 1
          %s1119 = scalar_lea.sflag [#allocation4], %s1118
          %s1120 = sand.u32 %s257, 1
          %s1121 = smul.addr %s1120, 8
          %s1122 = scalar_lea.vmem [#allocation8], %s1121
          %1123 = dma.done %s1119, 128
        $region88: #{vae_forward.1} parent=83 // pred_fallthru
          _
        // Predicated region
        $region89: #{vae_forward.1} parent=83 // pred_check
          %p1124 = pneg %p298
        $region90: #{vae_forward.1} parent=83 // pred_check_branch
          %1126 = sbr.rel (%p1124) target = $region92
        $region91: #{vae_forward.1} parent=83 // pred_region
          %p1127 = scmp.lt.s32.totalorder %s29, 1
          %s1128 = scalar_select %p1127, %s29, 1
          %s1129 = smul.addr %s1128, 2
          %s1130 = smul.addr %s1129, 8
          %s1131 = scalar_lea.vmem %s11, %s1130
        $region92: #{vae_forward.1} parent=83 // pred_fallthru
          _
      $region84: #{vae_forward.1} parent=5 // pred_fallthru
        _
    $region6: #{vae_forward.1} parent=1 // loop_footer
      %s27 = sadd.s32 1, %s23
    $region7: #{vae_forward.1} parent=1 // loop_footer_branch
      %22 = sbr.rel target = $region3
    $region8: #{vae_forward.1} parent=1 // loop_exit
      _
    %1132 = vsyncpa [#allocation3], 1
    %s1133 = scalar_lea.sflag [#allocation3], 1
    %1134 = vsyncpa %s1133, 1
    %1135 = vsyncpa [#allocation6], 1
    %1136 = vsyncpa [#allocation4], 1
    %s1137 = scalar_lea.sflag [#allocation4], 1
    %1138 = vsyncpa %s1137, 1

</llo_original>
